<compile_context>
chip_gen: v7x
topology: tpu7x:2x2x1
jax: 0.10.0
libtpu: 0.0.40
codegen_flags: <defaults>
</compile_context>

<pallas_src>
import math

import jax
import jax.numpy as jnp
from jax.experimental import pallas as pl
from jax.experimental.pallas import tpu as pltpu


def _round_up(a: int, m: int) -> int:
    return ((a + m - 1) // m) * m


# --------------------------------------------------------------------------
# Kernels (weights arrive pre-clamped and pre-transposed to (K, N) layout).
# --------------------------------------------------------------------------
def _dec1_kernel_single_k(x_ref, wt_ref, b_ref, o_ref):
    """K fits in one tile: grid is (M, N); compute + bias + store directly."""
    acc = jnp.dot(x_ref[...], wt_ref[...], preferred_element_type=jnp.float32)
    o_ref[...] = (acc + b_ref[...].astype(jnp.float32)).astype(o_ref.dtype)


def _dec1_kernel_kacc_f32out(x_ref, wt_ref, b_ref, o_ref):
    """K tiled, f32 output: accumulate directly into the VMEM-resident o_ref."""

    @pl.when(pl.program_id(2) == 0)
    def _init():
        o_ref[...] = jnp.broadcast_to(
            b_ref[...].astype(jnp.float32), o_ref.shape
        )

    o_ref[...] += jnp.dot(
        x_ref[...], wt_ref[...], preferred_element_type=jnp.float32
    )


def _dec1_kernel_kacc_scratch(x_ref, wt_ref, b_ref, o_ref, acc_ref):
    """K tiled, non-f32 output: f32 scratch accumulator, cast-store at last k."""
    k = pl.program_id(2)

    @pl.when(k == 0)
    def _init():
        acc_ref[...] = jnp.broadcast_to(
            b_ref[...].astype(jnp.float32), acc_ref.shape
        )

    acc_ref[...] += jnp.dot(
        x_ref[...], wt_ref[...], preferred_element_type=jnp.float32
    )

    @pl.when(k == pl.num_programs(2) - 1)
    def _finalize():
        o_ref[...] = acc_ref[...].astype(o_ref.dtype)


# --------------------------------------------------------------------------
# One-time parameter preparation (hoisted out of the per-call path).
# --------------------------------------------------------------------------
def prepare_dec1_params(weight, bias, *, stream_dtype=None):
    """Clamp, transpose to (in, out), pad to 128 multiples — once per param set.

    stream_dtype=jnp.bfloat16 halves weight HBM traffic and uses the native
    bf16 MXU path (f32 accumulation kept); default None preserves f32 numerics.
    """
    out_f, in_f = weight.shape
    assert bias.shape == (out_f,)
    Kp = _round_up(max(in_f, 1), 128)
    Np = _round_up(max(out_f, 1), 128)
    wt = jnp.clip(weight, -1.0, 1.0).T                 # clamp folded here (exact)
    wt = jnp.pad(wt, ((0, Kp - in_f), (0, Np - out_f)))
    if stream_dtype is not None:
        wt = wt.astype(stream_dtype)
    b = jnp.pad(bias.astype(jnp.float32), (0, Np - out_f)).reshape(1, Np)
    return {"wt": wt, "b": b, "in_features": in_f, "out_features": out_f}


# --------------------------------------------------------------------------
# VMEM budget / tile selection.
# --------------------------------------------------------------------------
def _vmem_cap_bytes() -> int:
    cap = 64 << 20  # conservative default (v7x per-TC physical VMEM)
    try:
        info = pltpu.get_tpu_info()
        cap = int(getattr(info, "vmem_capacity_bytes", cap))
    except Exception:
        pass
    if cap >= (128 << 20):
        return 100 << 20      # v5e / v6e: use most of the 128 MiB
    return 48 << 20           # v7x: leave headroom below 64 MiB physical


def _fit_tile(requested: int, dim: int, align: int = 128) -> int:
    """Round a user tile to an `align` multiple that divides `dim` (dim % align == 0)."""
    t = min(_round_up(max(requested, 1), align), dim)
    t = max(align, (t // align) * align)
    while dim % t:
        t -= align
    return t


def _pick_tm(Bp0: int, max_tm: int = 256) -> int:
    """Largest tm (multiple of 8) whose padding waste on the batch dim is modest."""
    for t in (256, 128, 64, 32, 16, 8):
        if t > max_tm or t > Bp0:
            continue
        if _round_up(Bp0, t) <= max(Bp0 * 5 // 4, Bp0 + 8):
            return t
    return min(Bp0, 8)


def _divisor_cands(dim: int):
    cands = [t for t in (2048, 1024, 512, 256, 128) if t <= dim and dim % t == 0]
    if dim not in cands:
        cands.insert(0, dim)   # full-extent tile is always a candidate
    return cands


def _choose_tiles(Bp0, Kp, Np, x_sz, w_sz, out_sz, cap, tm=None, tn=None, tk=None):
    if tm is None:
        tm = _pick_tm(Bp0)
    else:
        tm = min(_round_up(max(tm, 8), 8), Bp0)

    budget = max(cap - (8 << 20), 8 << 20)

    def est(tn_, tk_):
        return (
            2 * tm * tk_ * x_sz                 # double-buffered x tile
            + 2 * (tk_ * tn_ + 8 * tn_) * w_sz  # double-buffered Wt + bias tiles
            + 2 * tm * tn_ * out_sz             # double-buffered output tile
            + (0 if tk_ == Kp else tm * tn_ * 4)  # possible f32 accumulator
        )

    k_cands = [_fit_tile(tk, Kp)] if tk is not None else _divisor_cands(Kp)
    if tn is not None:
        n_cands = [_fit_tile(tn, Np)]
    else:
        n_cands = _divisor_cands(Np)
        if tm >= Bp0 and Np >= 256:
            # M grid collapses to 1: keep >= 2 N blocks so both v7x TCs get work.
            n_cands = sorted(n_cands, key=lambda t: (Np // t < 2, -t))

    for tk_ in k_cands:          # full-K first: drops the reduction pass entirely
        for tn_ in n_cands:      # then the largest weight DMA per step
            if est(tn_, tk_) <= budget:
                return tm, tn_, tk_
    return tm, min(n_cands), min(k_cands)


# --------------------------------------------------------------------------
# Forward.
# --------------------------------------------------------------------------
def dec1_forward(x, params, *, tm=None, tn=None, tk=None):
    """y = x @ clamp(W,-1,1).T + b using prepared params (see prepare_dec1_params)."""
    wt = params["wt"]          # (Kp, Np), pre-clamped, pre-transposed, pre-padded
    b = params["b"]            # (1, Np) f32
    in_f = params["in_features"]
    out_f = params["out_features"]
    Kp, Np = wt.shape

    orig_shape = x.shape
    if x.ndim == 1:
        x = x[None, :]
    elif x.ndim > 2:
        x = x.reshape(-1, orig_shape[-1])
    B, in_x = x.shape
    assert in_x == in_f

    out_dtype = x.dtype
    x_c = x
    if wt.dtype == jnp.bfloat16 and x_c.dtype != jnp.bfloat16:
        x_c = x_c.astype(jnp.bfloat16)   # bf16 streaming path (f32 accumulation)

    x_sz = jnp.dtype(x_c.dtype).itemsize
    w_sz = jnp.dtype(wt.dtype).itemsize
    out_sz = jnp.dtype(out_dtype).itemsize

    cap = _vmem_cap_bytes()
    Bp0 = _round_up(B, 8)
    tm, tn, tk = _choose_tiles(Bp0, Kp, Np, x_sz, w_sz, out_sz, cap,
                               tm=tm, tn=tn, tk=tk)
    Bp = _round_up(Bp0, tm)

    if (Bp != B) or (Kp != in_f):
        x_c = jnp.pad(x_c, ((0, Bp - B), (0, Kp - in_f)))

    grid_m = Bp // tm
    grid_n = Np // tn
    nk = Kp // tk

    if nk == 1:
        kernel = _dec1_kernel_single_k
        grid = (grid_m, grid_n)
        in_specs = [
            pl.BlockSpec((tm, Kp), lambda i, j: (i, 0)),   # x tile (full K)
            pl.BlockSpec((Kp, tn), lambda i, j: (0, j)),   # Wt tile (full K)
            pl.BlockSpec((1, tn), lambda i, j: (0, j)),    # bias slice
        ]
        out_specs = pl.BlockSpec((tm, tn), lambda i, j: (i, j))
        scratch = []
        dims = ("parallel", "parallel")
        tk_eff = Kp
    else:
        grid = (grid_m, grid_n, nk)
        in_specs = [
            pl.BlockSpec((tm, tk), lambda i, j, k: (i, k)),
            pl.BlockSpec((tk, tn), lambda i, j, k: (k, j)),
            pl.BlockSpec((1, tn), lambda i, j, k: (0, j)),
        ]
        out_specs = pl.BlockSpec((tm, tn), lambda i, j, k: (i, j))
        dims = ("parallel", "parallel", "arbitrary")
        tk_eff = tk
        if out_dtype == jnp.float32:
            kernel = _dec1_kernel_kacc_f32out
            scratch = []
        else:
            kernel = _dec1_kernel_kacc_scratch
            scratch = [pltpu.VMEM((tm, tn), jnp.float32)]

    bytes_est = (
        2 * tm * tk_eff * x_sz
        + 2 * (tk_eff * tn + 8 * tn) * w_sz
        + 2 * tm * tn * out_sz
        + (tm * tn * 4 if scratch else 0)
    )
    vmem_limit = int(min(max(2 * bytes_est, 16 << 20), cap))

    out_p = pl.pallas_call(
        kernel,
        out_shape=jax.ShapeDtypeStruct((Bp, Np), out_dtype),
        grid_spec=pltpu.PrefetchScalarGridSpec(
            num_scalar_prefetch=0,
            grid=grid,
            in_specs=in_specs,
            out_specs=out_specs,
            scratch_shapes=scratch,
        ),
        compiler_params=pltpu.CompilerParams(
            dimension_semantics=dims,
            vmem_limit_bytes=vmem_limit,
        ),
    )(x_c, wt, b)

    out = out_p[:B, :out_f]
    if len(orig_shape) == 1:
        return out[0]
    if len(orig_shape) > 2:
        return out.reshape(orig_shape[:-1] + (out_f,))
    return out


def dec1_apply(x, weight, bias, *, stream_dtype=None, **tile_kwargs):
    """Convenience: one-shot prep + forward (prefer prepare once + dec1_forward)."""
    return dec1_forward(
        x, prepare_dec1_params(weight, bias, stream_dtype=stream_dtype),
        **tile_kwargs,
    )


def init_dec1_params(key, in_features, out_features, dtype=jnp.float32):
    """Deterministic init matching nn.init.kaiming_uniform_(a=sqrt(5)) + uniform bias."""
    kw, kb = jax.random.split(key)
    fan_in = in_features
    gain = math.sqrt(2.0 / (1.0 + 5.0))
    bound_w = gain * math.sqrt(3.0 / fan_in)
    weight = jax.random.uniform(
        kw, (out_features, in_features), dtype, minval=-bound_w, maxval=bound_w
    )
    bound_b = 1.0 / math.sqrt(fan_in) if fan_in > 0 else 0.0
    bias = jax.random.uniform(
        kb, (out_features,), dtype, minval=-bound_b, maxval=bound_b
    )
    return weight, bias


if __name__ == "__main__":
    key = jax.random.PRNGKey(0)
    k_x, k_p, k_x2, k_p2, k_x3, k_p3 = jax.random.split(key, 6)

    # Test 1: small module-like shape -> single-K kernel (no reduction grid axis),
    # prepared params reused across calls (hoisted clamp/transpose/pad).
    batch, in_features, out_features = 8, 32, 16
    x = jax.random.normal(k_x, (batch, in_features), jnp.float32)
    weight, bias = init_dec1_params(k_p, in_features, out_features)
    params = prepare_dec1_params(weight, bias)        # one-time prep
    y = jax.block_until_ready(dec1_forward(x, params))
    y_ref = x @ jnp.clip(weight, -1.0, 1.0).T + bias
    assert y.shape == (batch, out_features)
    assert jnp.allclose(y, y_ref, atol=1e-5, rtol=1e-5)

    # Test 2: tiled-K reduction path with f32 output accumulated directly in o_ref
    # (grid = (2, 2, 4) with these explicit tiles).
    B2, in2, out2 = 32, 512, 256
    x2 = jax.random.normal(k_x2, (B2, in2), jnp.float32)
    w2, b2 = init_dec1_params(k_p2, in2, out2)
    y2 = jax.block_until_ready(dec1_apply(x2, w2, b2, tm=16, tn=128, tk=128))
    y2_ref = x2 @ jnp.clip(w2, -1.0, 1.0).T + b2
    assert jnp.allclose(y2, y2_ref, atol=1e-4, rtol=1e-4)

    # Test 3: non-f32 output with tiled K -> f32 scratch-accumulator variant.
    B3, in3, out3 = 16, 256, 128
    x3 = jax.random.normal(k_x3, (B3, in3), jnp.float32).astype(jnp.bfloat16)
    w3, b3 = init_dec1_params(k_p3, in3, out3)
    y3 = jax.block_until_ready(dec1_apply(x3, w3, b3, tm=8, tn=128, tk=128))
    y3_ref = x3.astype(jnp.float32) @ jnp.clip(w3, -1.0, 1.0).T + b3
    assert y3.dtype == jnp.bfloat16
    assert jnp.allclose(y3.astype(jnp.float32), y3_ref, atol=2e-2, rtol=2e-2)

    print("KERNEL_OK")
</pallas_src>

<mosaic_0001>
module attributes {stable_mosaic.version = 11 : i64} {
  func.func @_dec1_kernel_single_k(%arg0: i32, %arg1: i32, %arg2: memref<8x128xf32, #tpu.memory_space<vmem>>, %arg3: memref<128x128xf32, #tpu.memory_space<vmem>>, %arg4: memref<1x128xf32, #tpu.memory_space<vmem>>, %arg5: memref<8x128xf32, #tpu.memory_space<vmem>>) attributes {dimension_semantics = [#tpu.dimension_semantics<parallel>, #tpu.dimension_semantics<parallel>], iteration_bounds = array<i64: 1, 1>, scalar_prefetch = 0 : i64, scratch_operands = 0 : i64, tpu.core_type = #tpu.core_type<tc>, window_params = [{transform_indices = @transform_0, window_bounds = array<i64: 8, 128>}, {transform_indices = @transform_1, window_bounds = array<i64: 128, 128>}, {transform_indices = @transform_2, window_bounds = array<i64: 1, 128>}, {transform_indices = @transform_3, window_bounds = array<i64: 8, 128>}]} {
    %c0 = arith.constant 0 : index
    %c0_0 = arith.constant 0 : index
    %0 = vector.load %arg2[%c0, %c0_0] : memref<8x128xf32, #tpu.memory_space<vmem>>, vector<8x128xf32>
    %c0_1 = arith.constant 0 : index
    %c0_2 = arith.constant 0 : index
    %1 = vector.load %arg3[%c0_1, %c0_2] : memref<128x128xf32, #tpu.memory_space<vmem>>, vector<128x128xf32>
    %cst = arith.constant dense<0.000000e+00> : vector<8x128xf32>
    %2 = tpu.matmul %0, %1, %cst {dimension_numbers = #tpu.dot_dimension_numbers<[1], [0], [0], [1], [0, 0, 1, 1], [], []>} : vector<8x128xf32>, vector<128x128xf32>, vector<8x128xf32> -> vector<8x128xf32>
    %c0_3 = arith.constant 0 : index
    %c0_4 = arith.constant 0 : index
    %3 = vector.load %arg4[%c0_3, %c0_4] : memref<1x128xf32, #tpu.memory_space<vmem>>, vector<1x128xf32>
    %4 = vector.broadcast %3 : vector<1x128xf32> to vector<8x128xf32>
    %5 = arith.addf %2, %4 : vector<8x128xf32>
    %c0_5 = arith.constant 0 : index
    %c0_6 = arith.constant 0 : index
    %6 = vector.load %arg5[%c0_5, %c0_6] : memref<8x128xf32, #tpu.memory_space<vmem>>, vector<8x128xf32>
    tpu.vector_store %arg5[%c0_5, %c0_6], %5 {strides = array<i32>} : memref<8x128xf32, #tpu.memory_space<vmem>>, vector<8x128xf32>,
    return
  }
  func.func @transform_0(%arg0: i32, %arg1: i32) -> (i32, i32) {
    %c0_i32 = arith.constant 0 : i32
    %c0_i32_0 = arith.constant 0 : i32
    return %arg0, %c0_i32 : i32, i32
  }
  func.func @transform_1(%arg0: i32, %arg1: i32) -> (i32, i32) {
    %c0_i32 = arith.constant 0 : i32
    %c0_i32_0 = arith.constant 0 : i32
    return %c0_i32, %arg1 : i32, i32
  }
  func.func @transform_2(%arg0: i32, %arg1: i32) -> (i32, i32) {
    %c0_i32 = arith.constant 0 : i32
    %c0_i32_0 = arith.constant 0 : i32
    return %c0_i32, %arg1 : i32, i32
  }
  func.func @transform_3(%arg0: i32, %arg1: i32) -> (i32, i32) {
    %c0_i32 = arith.constant 0 : i32
    return %arg0, %arg1 : i32, i32
  }
}

</mosaic_0001>

<llo_original>
// kernel: tpu_custom_call.1
$region0: #{tpu_custom_call.1}
  #allocation0 [shape = 'u32[]', space=smem, size = 0x4, offset = 0x4, fixed_abs, tag = 'smem constant byte address 0x4 - core index']
  #allocation1 [shape = 'u32[144,128]{1,0:T(1,128)}', space=vmem, size = 0x12000, scoped, tag = 'internal scratch']
  %s0 = inlined_call_operand.hbm [shape: f32[8,128], index: 0, kind: input, shape index: {}]
  %s1 = inlined_call_operand.hbm [shape: f32[128,128], index: 1, kind: input, shape index: {}]
  %s2 = inlined_call_operand.vmem [shape: f32[1,128], index: 2, kind: input, shape index: {}]
  %s3 = inlined_call_operand.hbm [shape: f32[8,128], index: 3, kind: output, shape index: {}]
  %s4 = sld [smem:[#allocation0]]
  $region30: #{tpu_custom_call.1} parent=0
    _
  %s6 = ssub.s32 1, %s4
  %s7 = scalar_select 0, %s6, %s4
  $region1: #{tpu_custom_call.1} parent=0
    #allocation2 [shape = 'u8[4096]{0}', space=vmem, size = 0x1000, scoped, tag = 'input window, operand 0, single buffered']
    #allocation3 [shape = 's32[1]{0}', space=sflag, size = 0x4, scoped, tag = 'scoped memory for tpu_custom_call.1']
    #allocation4 [shape = 's32[1]{0}', space=sflag, size = 0x4, scoped, tag = 'scoped memory for tpu_custom_call.1']
    #allocation5 [shape = 'u8[65536]{0}', space=vmem, size = 0x10000, scoped, tag = 'input window, operand 1, single buffered']
    #allocation6 [shape = 's32[1]{0}', space=sflag, size = 0x4, scoped, tag = 'scoped memory for tpu_custom_call.1']
    #allocation7 [shape = 'u8[4096]{0}', space=vmem, size = 0x1000, scoped, tag = 'output window, operand 0, single buffered']
    %8 = vsyncpa [#allocation3], 0
    %9 = vsyncpa [#allocation6], 0
    %10 = vsyncpa [#allocation4], 0
    // Predicated region
    $region2: #{tpu_custom_call.1} parent=1 // pred_check
      _
    $region3: #{tpu_custom_call.1} parent=1 // pred_check_branch
      %12 = sbr.rel (0) target = $region5
    $region4: #{tpu_custom_call.1} parent=1 // pred_region
      %s14 = ssub.s32 128, 128
      %15 = vsyncadd [#allocation3], %s14
      %s17 = sshll.u32 [#allocation2], 4
      %s18 = int_to_ptr.vmem [resolvable:$true] %s17
      %20 = dma.hbm_to_vmem [thread:$0]  %s0, 128, %s18, [#allocation3]
    $region5: #{tpu_custom_call.1} parent=1 // pred_fallthru
      _
    // Predicated region
    $region6: #{tpu_custom_call.1} parent=1 // pred_check
      _
    $region7: #{tpu_custom_call.1} parent=1 // pred_check_branch
      %22 = sbr.rel (0) target = $region9
    $region8: #{tpu_custom_call.1} parent=1 // pred_region
      %s24 = ssub.s32 2048, 2048
      %25 = vsyncadd [#allocation6], %s24
      %s26 = sshll.u32 [#allocation5], 4
      %s27 = int_to_ptr.vmem [resolvable:$true] %s26
      %32 = dma.hbm_to_vmem [thread:$0]  %s1, 2048, %s27, [#allocation6], 128, 128, 8
    $region9: #{tpu_custom_call.1} parent=1 // pred_fallthru
      _
    // Predicated region
    $region10: #{tpu_custom_call.1} parent=1 // pred_check
      _
    $region11: #{tpu_custom_call.1} parent=1 // pred_check_branch
      %34 = sbr.rel (0) target = $region13
    $region12: #{tpu_custom_call.1} parent=1 // pred_region
      _
    $region13: #{tpu_custom_call.1} parent=1 // pred_fallthru
      _
    // Predicated region
    $region14: #{tpu_custom_call.1} parent=1 // pred_check
      _
    $region15: #{tpu_custom_call.1} parent=1 // pred_check_branch
      %36 = sbr.rel (0) target = $region17
    $region16: #{tpu_custom_call.1} parent=1 // pred_region
      %37 = dma.done [#allocation3], 128
    $region17: #{tpu_custom_call.1} parent=1 // pred_fallthru
      _
    // Predicated region
    $region18: #{tpu_custom_call.1} parent=1 // pred_check
      _
    $region19: #{tpu_custom_call.1} parent=1 // pred_check_branch
      %39 = sbr.rel (0) target = $region21
    $region20: #{tpu_custom_call.1} parent=1 // pred_region
      %40 = dma.done [#allocation6], 2048
    $region21: #{tpu_custom_call.1} parent=1 // pred_fallthru
      _
    %v41 = vld [vmem:[#allocation2] sm:$0xff]
    %v42 = vld [vmem:[#allocation5] sm:$0xff]
    %v43 = vld [vmem:[#allocation5 + $0x8] sm:$0xff]
    %v44 = vld [vmem:[#allocation5 + $0x10] sm:$0xff]
    %v45 = vld [vmem:[#allocation5 + $0x18] sm:$0xff]
    %v46 = vld [vmem:[#allocation5 + $0x20] sm:$0xff]
    %v47 = vld [vmem:[#allocation5 + $0x28] sm:$0xff]
    %v48 = vld [vmem:[#allocation5 + $0x30] sm:$0xff]
    %v49 = vld [vmem:[#allocation5 + $0x38] sm:$0xff]
    %v50 = vld [vmem:[#allocation5 + $0x40] sm:$0xff]
    %v51 = vld [vmem:[#allocation5 + $0x48] sm:$0xff]
    %v52 = vld [vmem:[#allocation5 + $0x50] sm:$0xff]
    %v53 = vld [vmem:[#allocation5 + $0x58] sm:$0xff]
    %v54 = vld [vmem:[#allocation5 + $0x60] sm:$0xff]
    %v55 = vld [vmem:[#allocation5 + $0x68] sm:$0xff]
    %v56 = vld [vmem:[#allocation5 + $0x70] sm:$0xff]
    %v57 = vld [vmem:[#allocation5 + $0x78] sm:$0xff]
    %v58 = vld [vmem:[%s2] sm:$0x1]
    %v60 = vlaneseq
    %v61 = vshrl.u32 %v60, 7
    %v62 = vsub.s32 0, %v61
    %v63 = vrot.slane %v58, %v62
    %65 = vmatprep.subr.mxu0 0.0
    %66 = vmatpush1.msra.mxu0 %v42
    %67 = vmatprep.subr.mxu0 0.0
    %68 = vmatpush1.msra.mxu0 %v43
    %69 = vmatprep.subr.mxu0 0.0
    %70 = vmatpush1.msra.mxu0 %v44
    %71 = vmatprep.subr.mxu0 0.0
    %72 = vmatpush1.msra.mxu0 %v45
    %73 = vmatprep.subr.mxu0 0.0
    %74 = vmatpush1.msra.mxu0 %v46
    %75 = vmatprep.subr.mxu0 0.0
    %76 = vmatpush1.msra.mxu0 %v47
    %77 = vmatprep.subr.mxu0 0.0
    %78 = vmatpush1.msra.mxu0 %v48
    %79 = vmatprep.subr.mxu0 0.0
    %80 = vmatpush1.msra.mxu0 %v49
    %81 = vmatprep.subr.mxu0 0.0
    %82 = vmatpush1.msra.mxu0 %v50
    %83 = vmatprep.subr.mxu0 0.0
    %84 = vmatpush1.msra.mxu0 %v51
    %85 = vmatprep.subr.mxu0 0.0
    %86 = vmatpush1.msra.mxu0 %v52
    %87 = vmatprep.subr.mxu0 0.0
    %88 = vmatpush1.msra.mxu0 %v53
    %89 = vmatprep.subr.mxu0 0.0
    %90 = vmatpush1.msra.mxu0 %v54
    %91 = vmatprep.subr.mxu0 0.0
    %92 = vmatpush1.msra.mxu0 %v55
    %93 = vmatprep.subr.mxu0 0.0
    %94 = vmatpush1.msra.mxu0 %v56
    %95 = vmatprep.subr.mxu0 0.0
    %96 = vmatpush1.msra.mxu0 %v57
    %97 = vmatprep.subr.mxu0 0.0
    %98 = vmatpush1.msra.mxu0 0.0
    %99 = vmatprep.subr.mxu0 0.0
    %100 = vmatpush1.msra.mxu0 0.0
    %101 = vmatprep.subr.mxu0 0.0
    %102 = vmatpush1.msra.mxu0 0.0
    %103 = vmatprep.subr.mxu0 0.0
    %104 = vmatpush1.msra.mxu0 0.0
    %105 = vmatprep.subr.mxu0 0.0
    %106 = vmatpush1.msra.mxu0 0.0
    %107 = vmatprep.subr.mxu0 0.0
    %108 = vmatpush1.msra.mxu0 0.0
    %109 = vmatprep.subr.mxu0 0.0
    %110 = vmatpush1.msra.mxu0 0.0
    %111 = vmatprep.subr.mxu0 0.0
    %112 = vmatpush1.msra.mxu0 0.0
    %113 = vmatprep.subr.mxu0 0.0
    %114 = vmatpush1.msra.mxu0 0.0
    %115 = vmatprep.subr.mxu0 0.0
    %116 = vmatpush1.msra.mxu0 0.0
    %117 = vmatprep.subr.mxu0 0.0
    %118 = vmatpush1.msra.mxu0 0.0
    %119 = vmatprep.subr.mxu0 0.0
    %120 = vmatpush1.msra.mxu0 0.0
    %121 = vmatprep.subr.mxu0 0.0
    %122 = vmatpush1.msra.mxu0 0.0
    %123 = vmatprep.subr.mxu0 0.0
    %124 = vmatpush1.msra.mxu0 0.0
    %125 = vmatprep.subr.mxu0 0.0
    %126 = vmatpush1.msra.mxu0 0.0
    %127 = vmatprep.subr.mxu0 0.0
    %128 = vmatpush1.msra.mxu0 0.0
    %129 = vmatprep.mubr.f32.mxu0 0.0
    %130 = vmatmul.mubr.f32.gmra.mrb[0].mxu0 %v41
    %v131 = vpop.f32.mrb[0].mxu0
    %v132 = vadd.f32 %v63, %v131
    %v133 = vpop.f32.mrb[0].mxu0
    %134 = vdwg.mxu0
    %135 = vst [vmem:[#allocation7] sm:$0xff] %v132
    // Predicated region
    $region22: #{tpu_custom_call.1} parent=1 // pred_check
      _
    $region23: #{tpu_custom_call.1} parent=1 // pred_check_branch
      %137 = sbr.rel (0) target = $region25
    $region24: #{tpu_custom_call.1} parent=1 // pred_region
      %s139 = ssub.s32 128, 128
      %140 = vsyncadd [#allocation4], %s139
      %s142 = sshll.u32 [#allocation7], 4
      %s143 = int_to_ptr.vmem [resolvable:$true] %s142
      %145 = dma.vmem_to_hbm [thread:$0]  %s143, 128, %s3, [#allocation4]
    $region25: #{tpu_custom_call.1} parent=1 // pred_fallthru
      _
    // Predicated region
    $region26: #{tpu_custom_call.1} parent=1 // pred_check
      _
    $region27: #{tpu_custom_call.1} parent=1 // pred_check_branch
      %147 = sbr.rel (0) target = $region29
    $region28: #{tpu_custom_call.1} parent=1 // pred_region
      %148 = dma.done [#allocation4], 128
    $region29: #{tpu_custom_call.1} parent=1 // pred_fallthru
      _
    %149 = vsyncpa [#allocation3], 1
    %150 = vsyncpa [#allocation6], 1
    %151 = vsyncpa [#allocation4], 1

</llo_original>
